<compile_context>
chip_gen: v5e
topology: v5e:2x2
jax: 0.10.0
libtpu: 0.0.40
codegen_flags: <defaults>
</compile_context>

<pallas_src>
import functools

import jax
import jax.numpy as jnp
from jax import lax
from jax.experimental import pallas as pl
from jax.experimental.pallas import tpu as pltpu

# ---- small synthetic problem sizes (consistent with the module's forward) ----
B = 2           # independent graphs / feature sets processed per call
N = 64          # number of graph nodes
F = 32          # isize (feature / hidden width)
NLAYERS = 2
NEIGHBOR = 8
GAMMA = 1.0
OMEGA = 0.5
EPS = 1e-8


# =============================== fused kernel =================================

def _fused_kernel(x_ref, a_ref, w_ref, b_ref, sd_ref, mask_ref,
                  snorm_ref, s_ref, *, nlayers, omega, eps):
    """Full GraphLearned forward for one graph (one grid step), VMEM-resident.

    x_ref   : (N, F)            features for this grid step
    a_ref   : (N, N)            GCN-normalized adjacency (shared)
    w_ref   : (nlayers, F, F)   packed GCN weights (shared)
    b_ref   : (nlayers, 1, F)   packed GCN biases  (shared)
    sd_ref  : (N, N)            distance-similarity graph (shared)
    mask_ref: (N, N)            0/1 float adjacency mask (shared)
    snorm_ref, s_ref : (N, N)   outputs
    """
    # MXU operands in bf16 (f32 accumulation); everything else stays f32.
    a_bf = a_ref[...].astype(jnp.bfloat16)                     # (N, N)
    h = x_ref[...]                                             # (N, F) f32

    # internal_forward: stacked GCN layers, ReLU between all but the last.
    for i in range(nlayers):
        w_bf = w_ref[i].astype(jnp.bfloat16)                   # (F, F)
        hw = jnp.dot(h.astype(jnp.bfloat16), w_bf,
                     preferred_element_type=jnp.float32)       # (N, F) f32
        h = jnp.dot(a_bf, hw.astype(jnp.bfloat16),
                    preferred_element_type=jnp.float32) + b_ref[i]
        if i != nlayers - 1:
            h = jnp.maximum(h, 0.0)

    # Cosine-similarity graph via row pre-normalization (rsqrt -> EUP slot):
    #   hn = h / sqrt(|h|^2 + eps);  s1 = relu(hn @ hn.T)
    hn = h * lax.rsqrt(jnp.sum(h * h, axis=1, keepdims=True) + eps)
    hn_bf = hn.astype(jnp.bfloat16)
    s1 = lax.dot_general(hn_bf, hn_bf, (((1,), (1,)), ((), ())),
                         preferred_element_type=jnp.float32)   # (N, N) f32
    s1 = jnp.maximum(s1, 0.0)                                  # where(s1 >= 0, s1, 0)

    # Blend with the distance graph and apply the 0/1 mask (single vmul).
    s = omega * s1 + (1.0 - omega) * sd_ref[...]
    s = s * mask_ref[...]

    # normalize_adj_symm: d^{-1/2} S d^{-1/2}.  S is symmetric here, so the
    # column sum supplies the right-side scaling without an XLU transpose.
    row = jnp.sum(s, axis=1, keepdims=True)                    # (N, 1)
    col = jnp.sum(s, axis=0, keepdims=True)                    # (1, N)
    s_norm = lax.rsqrt(row + 1e-20) * s * lax.rsqrt(col + 1e-20)

    snorm_ref[...] = s_norm
    s_ref[...] = s


# ================================ wrapper =====================================

def graph_learned_forward(features, a_norm, w_all, b_all, s_d, adj_mask_f,
                          omega=OMEGA, eps=EPS):
    """features: (B, N, F) or (N, F).  Returns (s_norm, s) with matching batch."""
    squeeze = features.ndim == 2
    if squeeze:
        features = features[None]
    bsz, n, f = features.shape
    nlayers = w_all.shape[0]

    # advisory cost hint: 2 matmuls per GCN layer + the N×N similarity matmul
    flops = bsz * (nlayers * (2 * n * f * f + 2 * n * n * f) + 2 * n * n * f)
    bytes_accessed = 4 * (bsz * (n * f + 2 * n * n)          # features + 2 outputs
                          + 3 * n * n                        # a_norm, s_d, adj_mask
                          + nlayers * (f * f + f))           # packed weights/biases
    cost = pl.CostEstimate(flops=flops, transcendentals=bsz * 3 * n,
                           bytes_accessed=bytes_accessed)

    kern = functools.partial(_fused_kernel, nlayers=nlayers, omega=omega, eps=eps)

    shared_nn = pl.BlockSpec((n, n), lambda b: (0, 0))        # stays VMEM-resident
    out_spec = pl.BlockSpec((None, n, n), lambda b: (b, 0, 0))

    s_norm, s = pl.pallas_call(
        kern,
        grid=(bsz,),
        in_specs=[
            pl.BlockSpec((None, n, f), lambda b: (b, 0, 0)),      # features[b]
            shared_nn,                                            # a_norm
            pl.BlockSpec((nlayers, f, f), lambda b: (0, 0, 0)),   # packed weights
            pl.BlockSpec((nlayers, 1, f), lambda b: (0, 0, 0)),   # packed biases
            shared_nn,                                            # s_d
            shared_nn,                                            # adj_mask
        ],
        out_specs=[out_spec, out_spec],
        out_shape=(jax.ShapeDtypeStruct((bsz, n, n), jnp.float32),
                   jax.ShapeDtypeStruct((bsz, n, n), jnp.float32)),
        compiler_params=pltpu.CompilerParams(
            dimension_semantics=("parallel",)),                   # v7x: both TCs
        cost_estimate=cost,
    )(features, a_norm, w_all, b_all, s_d, adj_mask_f)

    if squeeze:
        return s_norm[0], s[0]
    return s_norm, s


# ============================ pure-JAX reference ==============================

def reference_forward(features, a_norm, w_all, b_all, s_d, adj_mask_f,
                      omega=OMEGA, eps=EPS):
    def single(x):
        h = x
        for i in range(w_all.shape[0]):
            h = a_norm @ (h @ w_all[i]) + b_all[i]
            if i != w_all.shape[0] - 1:
                h = jnp.maximum(h, 0.0)
        hnorm = jnp.sqrt(jnp.sum(h * h, axis=1, keepdims=True))
        s1 = (h @ h.T) / (hnorm @ hnorm.T + eps)
        s1 = jnp.where(s1 >= 0, s1, 0.0)
        s = omega * s1 + (1.0 - omega) * s_d
        s = jnp.where(adj_mask_f > 0, s, 0.0)
        row = jnp.sum(s, axis=1, keepdims=True)
        col = jnp.sum(s, axis=0, keepdims=True)
        s_norm = s / jnp.sqrt(row + 1e-20) / jnp.sqrt(col + 1e-20)
        return s_norm, s
    return jax.vmap(single)(features)


# ====================== deterministic parameter / graph setup =================

def build_graph_params(key):
    k_coords, k_w = jax.random.split(key)

    # synthetic spatial coordinates -> pairwise distance matrix `dis`
    coords = jax.random.uniform(k_coords, (N, 2), dtype=jnp.float32)
    diff = coords[:, None, :] - coords[None, :, :]
    dis = jnp.sqrt(jnp.sum(diff * diff, axis=-1))               # (N, N), symmetric

    # __init__ logic (percent == 0 branch)
    d_sorted = jnp.sort(dis, axis=1)
    d_cut = jnp.median(d_sorted[:, NEIGHBOR])
    c1 = dis > 0.0
    c2 = dis <= d_cut
    adj_mask = jnp.logical_and(c1, c2)

    d_scaled = jnp.where(adj_mask, dis, jnp.inf) / d_cut
    s_d = 1.0 / jnp.exp(GAMMA * d_scaled ** 2)                  # inf -> 0 where masked

    # dense adjacency driving the GCN layers (symmetrized 0/1 mask),
    # with GCNConv-style self-loops + symmetric normalization
    adj = adj_mask.astype(jnp.float32)
    adj = jnp.maximum(adj, adj.T)
    a_hat = adj + jnp.eye(N, dtype=jnp.float32)
    deg = jnp.sum(a_hat, axis=1)
    d_inv_sqrt = 1.0 / jnp.sqrt(deg)
    a_norm = a_hat * d_inv_sqrt[:, None] * d_inv_sqrt[None, :]

    # GCN weights: deterministic glorot-uniform, zero bias (packed arrays)
    scale = (6.0 / (F + F)) ** 0.5
    w_list, b_list = [], []
    for wk in jax.random.split(k_w, NLAYERS):
        w_list.append(jax.random.uniform(wk, (F, F), minval=-scale,
                                         maxval=scale, dtype=jnp.float32))
        b_list.append(jnp.zeros((1, F), jnp.float32))
    w_all = jnp.stack(w_list, axis=0)                           # (nlayers, F, F)
    b_all = jnp.stack(b_list, axis=0)                           # (nlayers, 1, F)

    return a_norm, w_all, b_all, s_d, adj_mask.astype(jnp.float32)


if __name__ == "__main__":
    key = jax.random.PRNGKey(0)
    k_feat, k_graph = jax.random.split(key)

    features = jax.random.normal(k_feat, (B, N, F), dtype=jnp.float32)
    a_norm, w_all, b_all, s_d, adj_mask_f = build_graph_params(k_graph)

    s_norm, s = graph_learned_forward(features, a_norm, w_all, b_all,
                                      s_d, adj_mask_f)
    jax.block_until_ready((s_norm, s))

    assert s_norm.shape == (B, N, N) and s.shape == (B, N, N)
    assert jnp.all(jnp.isfinite(s_norm)) and jnp.all(jnp.isfinite(s))

    # loose check vs. the f32 pure-JAX reference (bf16 MXU operands shift
    # similarity values at the ~1e-3 level)
    s_norm_ref, s_ref = reference_forward(features, a_norm, w_all, b_all,
                                          s_d, adj_mask_f)
    assert float(jnp.max(jnp.abs(s - s_ref))) < 5e-2
    assert float(jnp.max(jnp.abs(s_norm - s_norm_ref))) < 5e-2

    print("KERNEL_OK")
</pallas_src>

<mosaic_0001>
module attributes {stable_mosaic.version = 11 : i64} {
  func.func @_fused_kernel(%arg0: i32, %arg1: memref<1x64x32xf32, #tpu.memory_space<vmem>>, %arg2: memref<64x64xf32, #tpu.memory_space<vmem>>, %arg3: memref<2x32x32xf32, #tpu.memory_space<vmem>>, %arg4: memref<2x1x32xf32, #tpu.memory_space<vmem>>, %arg5: memref<64x64xf32, #tpu.memory_space<vmem>>, %arg6: memref<64x64xf32, #tpu.memory_space<vmem>>, %arg7: memref<1x64x64xf32, #tpu.memory_space<vmem>>, %arg8: memref<1x64x64xf32, #tpu.memory_space<vmem>>) attributes {dimension_semantics = [#tpu.dimension_semantics<parallel>], iteration_bounds = array<i64: 2>, scalar_prefetch = 0 : i64, scratch_operands = 0 : i64, tpu.core_type = #tpu.core_type<tc>, window_params = [{transform_indices = @transform_0, window_bounds = array<i64: 1, 64, 32>}, {pipeline_mode = #tpu.pipeline_mode<synchronous>, transform_indices = @transform_1, window_bounds = array<i64: 64, 64>}, {pipeline_mode = #tpu.pipeline_mode<synchronous>, transform_indices = @transform_2, window_bounds = array<i64: 2, 32, 32>}, {pipeline_mode = #tpu.pipeline_mode<synchronous>, transform_indices = @transform_3, window_bounds = array<i64: 2, 1, 32>}, {pipeline_mode = #tpu.pipeline_mode<synchronous>, transform_indices = @transform_4, window_bounds = array<i64: 64, 64>}, {pipeline_mode = #tpu.pipeline_mode<synchronous>, transform_indices = @transform_5, window_bounds = array<i64: 64, 64>}, {transform_indices = @transform_6, window_bounds = array<i64: 1, 64, 64>}, {transform_indices = @transform_7, window_bounds = array<i64: 1, 64, 64>}]} {
    %c0 = arith.constant 0 : index
    %c0_0 = arith.constant 0 : index
    %0 = vector.load %arg2[%c0, %c0_0] : memref<64x64xf32, #tpu.memory_space<vmem>>, vector<64x64xf32>
    %1 = arith.truncf %0 : vector<64x64xf32> to vector<64x64xbf16>
    %c0_1 = arith.constant 0 : index
    %c0_2 = arith.constant 0 : index
    %c0_3 = arith.constant 0 : index
    %2 = vector.load %arg1[%c0_1, %c0_2, %c0_3] : memref<1x64x32xf32, #tpu.memory_space<vmem>>, vector<1x64x32xf32>
    %3 = vector.shape_cast %2 : vector<1x64x32xf32> to vector<64x32xf32>
    %c0_4 = arith.constant 0 : index
    %c0_5 = arith.constant 0 : index
    %c0_6 = arith.constant 0 : index
    %4 = vector.load %arg3[%c0_4, %c0_5, %c0_6] : memref<2x32x32xf32, #tpu.memory_space<vmem>>, vector<1x32x32xf32>
    %5 = vector.shape_cast %4 : vector<1x32x32xf32> to vector<32x32xf32>
    %6 = arith.truncf %5 : vector<32x32xf32> to vector<32x32xbf16>
    %7 = arith.truncf %3 : vector<64x32xf32> to vector<64x32xbf16>
    %cst = arith.constant dense<0.000000e+00> : vector<64x32xf32>
    %8 = tpu.matmul %7, %6, %cst {dimension_numbers = #tpu.dot_dimension_numbers<[1], [0], [0], [1], [0, 0, 1, 1], [], []>} : vector<64x32xbf16>, vector<32x32xbf16>, vector<64x32xf32> -> vector<64x32xf32>
    %9 = arith.truncf %8 : vector<64x32xf32> to vector<64x32xbf16>
    %cst_7 = arith.constant dense<0.000000e+00> : vector<64x32xf32>
    %10 = tpu.matmul %1, %9, %cst_7 {dimension_numbers = #tpu.dot_dimension_numbers<[1], [0], [0], [1], [0, 0, 1, 1], [], []>} : vector<64x64xbf16>, vector<64x32xbf16>, vector<64x32xf32> -> vector<64x32xf32>
    %c0_8 = arith.constant 0 : index
    %c0_9 = arith.constant 0 : index
    %c0_10 = arith.constant 0 : index
    %11 = vector.load %arg4[%c0_8, %c0_9, %c0_10] : memref<2x1x32xf32, #tpu.memory_space<vmem>>, vector<1x1x32xf32>
    %12 = vector.shape_cast %11 : vector<1x1x32xf32> to vector<1x32xf32>
    %13 = vector.broadcast %12 : vector<1x32xf32> to vector<64x32xf32>
    %14 = arith.addf %10, %13 : vector<64x32xf32>
    %cst_11 = arith.constant 0.000000e+00 : f32
    %15 = vector.broadcast %cst_11 : f32 to vector<64x32xf32>
    %16 = arith.maximumf %14, %15 : vector<64x32xf32>
    %c1 = arith.constant 1 : index
    %c0_12 = arith.constant 0 : index
    %c0_13 = arith.constant 0 : index
    %17 = vector.load %arg3[%c1, %c0_12, %c0_13] : memref<2x32x32xf32, #tpu.memory_space<vmem>>, vector<1x32x32xf32>
    %18 = vector.shape_cast %17 : vector<1x32x32xf32> to vector<32x32xf32>
    %19 = arith.truncf %18 : vector<32x32xf32> to vector<32x32xbf16>
    %20 = arith.truncf %16 : vector<64x32xf32> to vector<64x32xbf16>
    %cst_14 = arith.constant dense<0.000000e+00> : vector<64x32xf32>
    %21 = tpu.matmul %20, %19, %cst_14 {dimension_numbers = #tpu.dot_dimension_numbers<[1], [0], [0], [1], [0, 0, 1, 1], [], []>} : vector<64x32xbf16>, vector<32x32xbf16>, vector<64x32xf32> -> vector<64x32xf32>
    %22 = arith.truncf %21 : vector<64x32xf32> to vector<64x32xbf16>
    %cst_15 = arith.constant dense<0.000000e+00> : vector<64x32xf32>
    %23 = tpu.matmul %1, %22, %cst_15 {dimension_numbers = #tpu.dot_dimension_numbers<[1], [0], [0], [1], [0, 0, 1, 1], [], []>} : vector<64x64xbf16>, vector<64x32xbf16>, vector<64x32xf32> -> vector<64x32xf32>
    %c1_16 = arith.constant 1 : index
    %c0_17 = arith.constant 0 : index
    %c0_18 = arith.constant 0 : index
    %24 = vector.load %arg4[%c1_16, %c0_17, %c0_18] : memref<2x1x32xf32, #tpu.memory_space<vmem>>, vector<1x1x32xf32>
    %25 = vector.shape_cast %24 : vector<1x1x32xf32> to vector<1x32xf32>
    %26 = vector.broadcast %25 : vector<1x32xf32> to vector<64x32xf32>
    %27 = arith.addf %23, %26 : vector<64x32xf32>
    %28 = arith.mulf %27, %27 : vector<64x32xf32>
    %cst_19 = arith.constant dense<0.000000e+00> : vector<64xf32>
    %29 = vector.multi_reduction <add>, %28, %cst_19 [1] : vector<64x32xf32> to vector<64xf32>
    %30 = vector.shape_cast %29 : vector<64xf32> to vector<64x1xf32>
    %cst_20 = arith.constant 9.99999993E-9 : f32
    %31 = vector.broadcast %cst_20 : f32 to vector<64x1xf32>
    %32 = arith.addf %30, %31 : vector<64x1xf32>
    %33 = math.rsqrt %32 : vector<64x1xf32>
    %34 = vector.broadcast %33 : vector<64x1xf32> to vector<64x32xf32>
    %35 = arith.mulf %27, %34 : vector<64x32xf32>
    %36 = arith.truncf %35 : vector<64x32xf32> to vector<64x32xbf16>
    %cst_21 = arith.constant dense<0.000000e+00> : vector<64x64xf32>
    %37 = tpu.matmul %36, %36, %cst_21 {dimension_numbers = #tpu.dot_dimension_numbers<[1], [1], [0], [0], [0, 0, 1, 0], [], []>} : vector<64x32xbf16>, vector<64x32xbf16>, vector<64x64xf32> -> vector<64x64xf32>
    %cst_22 = arith.constant 0.000000e+00 : f32
    %38 = vector.broadcast %cst_22 : f32 to vector<64x64xf32>
    %39 = arith.maximumf %37, %38 : vector<64x64xf32>
    %cst_23 = arith.constant 5.000000e-01 : f32
    %40 = vector.broadcast %cst_23 : f32 to vector<64x64xf32>
    %41 = arith.mulf %40, %39 : vector<64x64xf32>
    %c0_24 = arith.constant 0 : index
    %c0_25 = arith.constant 0 : index
    %42 = vector.load %arg5[%c0_24, %c0_25] : memref<64x64xf32, #tpu.memory_space<vmem>>, vector<64x64xf32>
    %cst_26 = arith.constant 5.000000e-01 : f32
    %43 = vector.broadcast %cst_26 : f32 to vector<64x64xf32>
    %44 = arith.mulf %43, %42 : vector<64x64xf32>
    %45 = arith.addf %41, %44 : vector<64x64xf32>
    %c0_27 = arith.constant 0 : index
    %c0_28 = arith.constant 0 : index
    %46 = vector.load %arg6[%c0_27, %c0_28] : memref<64x64xf32, #tpu.memory_space<vmem>>, vector<64x64xf32>
    %47 = arith.mulf %45, %46 : vector<64x64xf32>
    %cst_29 = arith.constant dense<0.000000e+00> : vector<64xf32>
    %48 = vector.multi_reduction <add>, %47, %cst_29 [1] : vector<64x64xf32> to vector<64xf32>
    %49 = vector.shape_cast %48 : vector<64xf32> to vector<64x1xf32>
    %cst_30 = arith.constant dense<0.000000e+00> : vector<64xf32>
    %50 = vector.multi_reduction <add>, %47, %cst_30 [0] : vector<64x64xf32> to vector<64xf32>
    %51 = vector.shape_cast %50 : vector<64xf32> to vector<1x64xf32>
    %cst_31 = arith.constant 9.99999968E-21 : f32
    %52 = vector.broadcast %cst_31 : f32 to vector<64x1xf32>
    %53 = arith.addf %49, %52 : vector<64x1xf32>
    %54 = math.rsqrt %53 : vector<64x1xf32>
    %55 = vector.broadcast %54 : vector<64x1xf32> to vector<64x64xf32>
    %56 = arith.mulf %55, %47 : vector<64x64xf32>
    %cst_32 = arith.constant 9.99999968E-21 : f32
    %57 = vector.broadcast %cst_32 : f32 to vector<1x64xf32>
    %58 = arith.addf %51, %57 : vector<1x64xf32>
    %59 = math.rsqrt %58 : vector<1x64xf32>
    %60 = vector.broadcast %59 : vector<1x64xf32> to vector<64x64xf32>
    %61 = arith.mulf %56, %60 : vector<64x64xf32>
    %c0_33 = arith.constant 0 : index
    %c0_34 = arith.constant 0 : index
    %c0_35 = arith.constant 0 : index
    %62 = vector.load %arg7[%c0_33, %c0_34, %c0_35] : memref<1x64x64xf32, #tpu.memory_space<vmem>>, vector<1x64x64xf32>
    %63 = vector.shape_cast %62 : vector<1x64x64xf32> to vector<64x64xf32>
    %64 = vector.shape_cast %61 : vector<64x64xf32> to vector<1x64x64xf32>
    tpu.vector_store %arg7[%c0_33, %c0_34, %c0_35], %64 {strides = array<i32>} : memref<1x64x64xf32, #tpu.memory_space<vmem>>, vector<1x64x64xf32>,
    %c0_36 = arith.constant 0 : index
    %c0_37 = arith.constant 0 : index
    %c0_38 = arith.constant 0 : index
    %65 = vector.load %arg8[%c0_36, %c0_37, %c0_38] : memref<1x64x64xf32, #tpu.memory_space<vmem>>, vector<1x64x64xf32>
    %66 = vector.shape_cast %65 : vector<1x64x64xf32> to vector<64x64xf32>
    %67 = vector.shape_cast %47 : vector<64x64xf32> to vector<1x64x64xf32>
    tpu.vector_store %arg8[%c0_36, %c0_37, %c0_38], %67 {strides = array<i32>} : memref<1x64x64xf32, #tpu.memory_space<vmem>>, vector<1x64x64xf32>,
    return
  }
  func.func @transform_0(%arg0: i32) -> (i32, i32, i32) {
    %c0_i32 = arith.constant 0 : i32
    %c0_i32_0 = arith.constant 0 : i32
    %c0_i32_1 = arith.constant 0 : i32
    return %arg0, %c0_i32, %c0_i32_0 : i32, i32, i32
  }
  func.func @transform_1(%arg0: i32) -> (i32, i32) {
    %c0_i32 = arith.constant 0 : i32
    %c0_i32_0 = arith.constant 0 : i32
    %c0_i32_1 = arith.constant 0 : i32
    return %c0_i32, %c0_i32_0 : i32, i32
  }
  func.func @transform_2(%arg0: i32) -> (i32, i32, i32) {
    %c0_i32 = arith.constant 0 : i32
    %c0_i32_0 = arith.constant 0 : i32
    %c0_i32_1 = arith.constant 0 : i32
    %c0_i32_2 = arith.constant 0 : i32
    return %c0_i32, %c0_i32_0, %c0_i32_1 : i32, i32, i32
  }
  func.func @transform_3(%arg0: i32) -> (i32, i32, i32) {
    %c0_i32 = arith.constant 0 : i32
    %c0_i32_0 = arith.constant 0 : i32
    %c0_i32_1 = arith.constant 0 : i32
    %c0_i32_2 = arith.constant 0 : i32
    return %c0_i32, %c0_i32_0, %c0_i32_1 : i32, i32, i32
  }
  func.func @transform_4(%arg0: i32) -> (i32, i32) {
    %c0_i32 = arith.constant 0 : i32
    %c0_i32_0 = arith.constant 0 : i32
    %c0_i32_1 = arith.constant 0 : i32
    return %c0_i32, %c0_i32_0 : i32, i32
  }
  func.func @transform_5(%arg0: i32) -> (i32, i32) {
    %c0_i32 = arith.constant 0 : i32
    %c0_i32_0 = arith.constant 0 : i32
    %c0_i32_1 = arith.constant 0 : i32
    return %c0_i32, %c0_i32_0 : i32, i32
  }
  func.func @transform_6(%arg0: i32) -> (i32, i32, i32) {
    %c0_i32 = arith.constant 0 : i32
    %c0_i32_0 = arith.constant 0 : i32
    %c0_i32_1 = arith.constant 0 : i32
    return %arg0, %c0_i32, %c0_i32_0 : i32, i32, i32
  }
  func.func @transform_7(%arg0: i32) -> (i32, i32, i32) {
    %c0_i32 = arith.constant 0 : i32
    %c0_i32_0 = arith.constant 0 : i32
    %c0_i32_1 = arith.constant 0 : i32
    return %arg0, %c0_i32, %c0_i32_0 : i32, i32, i32
  }
}

</mosaic_0001>

<llo_original>
// kernel: tpu_custom_call.1
$region0: #{tpu_custom_call.1}
  #allocation0 [shape = 'u32[]', space=smem, size = 0x4, offset = 0x4, fixed_abs, tag = 'smem constant byte address 0x4 - core index']
  #allocation1 [shape = 'u32[72,128]{1,0:T(1,128)}', space=vmem, size = 0x9000, scoped, tag = 'internal scratch']
  %s0 = inlined_call_operand.vmem [shape: f32[2,64,32], index: 0, kind: input, shape index: {}]
  %s1 = inlined_call_operand.vmem [shape: f32[64,64], index: 1, kind: input, shape index: {}]
  %s2 = inlined_call_operand.vmem [shape: f32[2,32,32], index: 2, kind: input, shape index: {}]
  %s3 = inlined_call_operand.vmem [shape: f32[2,1,32], index: 3, kind: input, shape index: {}]
  %s4 = inlined_call_operand.vmem [shape: f32[64,64], index: 4, kind: input, shape index: {}]
  %s5 = inlined_call_operand.hbm [shape: f32[64,64], index: 5, kind: input, shape index: {}]
  %s6 = inlined_call_operand.hbm [shape: f32[2,64,64], index: 6, kind: output, shape index: {0}]
  %s7 = inlined_call_operand.hbm [shape: f32[2,64,64], index: 7, kind: output, shape index: {1}]
  %8 = xla_tuple %s6, %s7
  %s9 = sld [smem:[#allocation0]]
  $region69: #{tpu_custom_call.1} parent=0
    _
  %s11 = ssub.s32 1, %s9
  %s12 = scalar_select 0, %s11, %s9
  $region1: #{tpu_custom_call.1} parent=0
    #allocation2 [shape = 'u8[32768]{0}', space=vmem, size = 0x8000, scoped, tag = 'input window, operand 5, single buffered']
    #allocation3 [shape = 's32[2]{0}', space=sflag, size = 0x8, scoped, tag = 'scoped memory for tpu_custom_call.1']
    #allocation4 [shape = 's32[2]{0}', space=sflag, size = 0x8, scoped, tag = 'scoped memory for tpu_custom_call.1']
    #allocation5 [shape = 'u8[65536]{0}', space=vmem, size = 0x10000, scoped, tag = 'output window, operand 0']
    #allocation6 [shape = 'u8[65536]{0}', space=vmem, size = 0x10000, scoped, tag = 'output window, operand 1']
    #allocation7 [shape = 's32[2]{0}', space=sflag, size = 0x8, scoped, tag = 'scoped memory for tpu_custom_call.1']
    %13 = vsyncpa [#allocation3], 0
    %14 = vsyncpa [#allocation4], 0
    %s15 = scalar_lea.sflag [#allocation4], 1
    %16 = vsyncpa %s15, 0
    %17 = vsyncpa [#allocation7], 0
    %s18 = scalar_lea.sflag [#allocation7], 1
    %19 = vsyncpa %s18, 0
    loop: start=0, step=1, limit=4
    $region2: #{tpu_custom_call.1} parent=1 // loop_pre_header
      _
    $region3: #{tpu_custom_call.1} parent=1 // loop_header
      %s21 = sphi 0, %s25
      %p22 = scmp.ge.s32.totalorder %s21, 4
      %s31 = sphi 0, %s33
      %s34 = sphi 0, %s31
      %s35 = sphi 0, %s34
      %s51 = sphi 0, %s35
      %s55 = sphi 0, %s55
      %s57 = sphi 0, %s55
      %s58 = sphi 0, %s57
      %s72 = sphi 0, %s58
      %s76 = sphi 0, %s76
      %s78 = sphi 0, %s76
      %s79 = sphi 0, %s78
      %s93 = sphi 0, %s79
      %s97 = sphi 0, %s97
      %s99 = sphi 0, %s97
      %s100 = sphi 0, %s99
      %s114 = sphi 0, %s100
      %s118 = sphi 0, %s118
      %s120 = sphi 0, %s118
      %s121 = sphi 0, %s120
      %s135 = sphi 0, %s121
      %s139 = sphi 0, %s139
      %s141 = sphi 0, %s139
      %s142 = sphi 0, %s141
      %s156 = sphi 0, %s142
      %s162 = sphi 0, %s164
      %s165 = sphi 0, %s162
      %s166 = sphi 0, %s165
      %s182 = sphi 0, %s166
      %s188 = sphi 0, %s190
      %s191 = sphi 0, %s188
      %s192 = sphi 0, %s191
      %s208 = sphi 0, %s192
    $region4: #{tpu_custom_call.1} parent=1 // loop_header_branch
      %24 = sbr.rel (%p22) target = $region8
    $region5: #{tpu_custom_call.1} parent=1 // loop_body
      %s26 = ssub.s32 %s21, 1
      %s27 = ssub.s32 %s21, 2
      %s28 = sadd.s32 %s21, 1
      %s29 = ssub.s32 %s21, %s28
      %p30 = scmp.eq.s32.totalorder %s29, 0
      %s32 = sadd.s32 %s31, 1
      %s33 = scalar_select %p30, %s31, %s32
      %p36 = pneg %p30
      %p37 = scmp.eq.s32.totalorder %s21, 1
      %p38 = por %p36, %p37
      %p39 = scmp.ne.s32.totalorder %s31, %s34
      %p40 = scmp.eq.s32.totalorder %s21, 0
      %p41 = por %p39, %p40
      %p42 = scmp.ne.s32.totalorder %s31, %s34
      %p43 = scmp.eq.s32.totalorder %s26, 1
      %p44 = por %p42, %p43
      %p45 = scmp.ne.s32.totalorder %s34, %s35
      %p46 = scmp.eq.s32.totalorder %s26, 0
      %p47 = por %p45, %p46
      %p48 = scmp.ne.s32.totalorder %s34, %s35
      %p49 = scmp.eq.s32.totalorder %s27, 1
      %p50 = por %p48, %p49
      %p52 = scmp.ne.s32.totalorder %s35, %s51
      %p53 = scmp.eq.s32.totalorder %s27, 0
      %p54 = por %p52, %p53
      %s56 = sadd.s32 %s55, 1
      %p59 = scmp.eq.s32.totalorder %s21, 1
      %p60 = scmp.ne.s32.totalorder %s55, %s57
      %p61 = scmp.eq.s32.totalorder %s21, 0
      %p62 = por %p60, %p61
      %p63 = scmp.ne.s32.totalorder %s55, %s57
      %p64 = scmp.eq.s32.totalorder %s26, 1
      %p65 = por %p63, %p64
      %p66 = scmp.ne.s32.totalorder %s57, %s58
      %p67 = scmp.eq.s32.totalorder %s26, 0
      %p68 = por %p66, %p67
      %p69 = scmp.ne.s32.totalorder %s57, %s58
      %p70 = scmp.eq.s32.totalorder %s27, 1
      %p71 = por %p69, %p70
      %p73 = scmp.ne.s32.totalorder %s58, %s72
      %p74 = scmp.eq.s32.totalorder %s27, 0
      %p75 = por %p73, %p74
      %s77 = sadd.s32 %s76, 1
      %p80 = scmp.eq.s32.totalorder %s21, 1
      %p81 = scmp.ne.s32.totalorder %s76, %s78
      %p82 = scmp.eq.s32.totalorder %s21, 0
      %p83 = por %p81, %p82
      %p84 = scmp.ne.s32.totalorder %s76, %s78
      %p85 = scmp.eq.s32.totalorder %s26, 1
      %p86 = por %p84, %p85
      %p87 = scmp.ne.s32.totalorder %s78, %s79
      %p88 = scmp.eq.s32.totalorder %s26, 0
      %p89 = por %p87, %p88
      %p90 = scmp.ne.s32.totalorder %s78, %s79
      %p91 = scmp.eq.s32.totalorder %s27, 1
      %p92 = por %p90, %p91
      %p94 = scmp.ne.s32.totalorder %s79, %s93
      %p95 = scmp.eq.s32.totalorder %s27, 0
      %p96 = por %p94, %p95
      %s98 = sadd.s32 %s97, 1
      %p101 = scmp.eq.s32.totalorder %s21, 1
      %p102 = scmp.ne.s32.totalorder %s97, %s99
      %p103 = scmp.eq.s32.totalorder %s21, 0
      %p104 = por %p102, %p103
      %p105 = scmp.ne.s32.totalorder %s97, %s99
      %p106 = scmp.eq.s32.totalorder %s26, 1
      %p107 = por %p105, %p106
      %p108 = scmp.ne.s32.totalorder %s99, %s100
      %p109 = scmp.eq.s32.totalorder %s26, 0
      %p110 = por %p108, %p109
      %p111 = scmp.ne.s32.totalorder %s99, %s100
      %p112 = scmp.eq.s32.totalorder %s27, 1
      %p113 = por %p111, %p112
      %p115 = scmp.ne.s32.totalorder %s100, %s114
      %p116 = scmp.eq.s32.totalorder %s27, 0
      %p117 = por %p115, %p116
      %s119 = sadd.s32 %s118, 1
      %p122 = scmp.eq.s32.totalorder %s21, 1
      %p123 = scmp.ne.s32.totalorder %s118, %s120
      %p124 = scmp.eq.s32.totalorder %s21, 0
      %p125 = por %p123, %p124
      %p126 = scmp.ne.s32.totalorder %s118, %s120
      %p127 = scmp.eq.s32.totalorder %s26, 1
      %p128 = por %p126, %p127
      %p129 = scmp.ne.s32.totalorder %s120, %s121
      %p130 = scmp.eq.s32.totalorder %s26, 0
      %p131 = por %p129, %p130
      %p132 = scmp.ne.s32.totalorder %s120, %s121
      %p133 = scmp.eq.s32.totalorder %s27, 1
      %p134 = por %p132, %p133
      %p136 = scmp.ne.s32.totalorder %s121, %s135
      %p137 = scmp.eq.s32.totalorder %s27, 0
      %p138 = por %p136, %p137
      %s140 = sadd.s32 %s139, 1
      %p143 = scmp.eq.s32.totalorder %s21, 1
      %p144 = scmp.ne.s32.totalorder %s139, %s141
      %p145 = scmp.eq.s32.totalorder %s21, 0
      %p146 = por %p144, %p145
      %p147 = scmp.ne.s32.totalorder %s139, %s141
      %p148 = scmp.eq.s32.totalorder %s26, 1
      %p149 = por %p147, %p148
      %p150 = scmp.ne.s32.totalorder %s141, %s142
      %p151 = scmp.eq.s32.totalorder %s26, 0
      %p152 = por %p150, %p151
      %p153 = scmp.ne.s32.totalorder %s141, %s142
      %p154 = scmp.eq.s32.totalorder %s27, 1
      %p155 = por %p153, %p154
      %p157 = scmp.ne.s32.totalorder %s142, %s156
      %p158 = scmp.eq.s32.totalorder %s27, 0
      %p159 = por %p157, %p158
      %s160 = ssub.s32 %s21, %s28
      %p161 = scmp.eq.s32.totalorder %s160, 0
      %s163 = sadd.s32 %s162, 1
      %s164 = scalar_select %p161, %s162, %s163
      %p167 = pneg %p161
      %p168 = scmp.eq.s32.totalorder %s21, 1
      %p169 = por %p167, %p168
      %p170 = scmp.ne.s32.totalorder %s162, %s165
      %p171 = scmp.eq.s32.totalorder %s21, 0
      %p172 = por %p170, %p171
      %p173 = scmp.ne.s32.totalorder %s162, %s165
      %p174 = scmp.eq.s32.totalorder %s26, 1
      %p175 = por %p173, %p174
      %p176 = scmp.ne.s32.totalorder %s165, %s166
      %p177 = scmp.eq.s32.totalorder %s26, 0
      %p178 = por %p176, %p177
      %p179 = scmp.ne.s32.totalorder %s165, %s166
      %p180 = scmp.eq.s32.totalorder %s27, 1
      %p181 = por %p179, %p180
      %p183 = scmp.ne.s32.totalorder %s166, %s182
      %p184 = scmp.eq.s32.totalorder %s27, 0
      %p185 = por %p183, %p184
      %s186 = ssub.s32 %s21, %s28
      %p187 = scmp.eq.s32.totalorder %s186, 0
      %s189 = sadd.s32 %s188, 1
      %s190 = scalar_select %p187, %s188, %s189
      %p193 = pneg %p187
      %p194 = scmp.eq.s32.totalorder %s21, 1
      %p195 = por %p193, %p194
      %p196 = scmp.ne.s32.totalorder %s188, %s191
      %p197 = scmp.eq.s32.totalorder %s21, 0
      %p198 = por %p196, %p197
      %p199 = scmp.ne.s32.totalorder %s188, %s191
      %p200 = scmp.eq.s32.totalorder %s26, 1
      %p201 = por %p199, %p200
      %p202 = scmp.ne.s32.totalorder %s191, %s192
      %p203 = scmp.eq.s32.totalorder %s26, 0
      %p204 = por %p202, %p203
      %p205 = scmp.ne.s32.totalorder %s191, %s192
      %p206 = scmp.eq.s32.totalorder %s27, 1
      %p207 = por %p205, %p206
      %p209 = scmp.ne.s32.totalorder %s192, %s208
      %p210 = scmp.eq.s32.totalorder %s27, 0
      %p211 = por %p209, %p210
      %p212 = scmp.le.s32.totalorder 1, %s21
      %p213 = scmp.lt.s32.totalorder %s21, 3
      %p214 = pnand %p212, %p213
      %p215 = pneg %p214
      // Predicated region
      $region9: #{tpu_custom_call.1} parent=5 // pred_check
        _
      $region10: #{tpu_custom_call.1} parent=5 // pred_check_branch
        %217 = sbr.rel (%p214) target = $region12
      $region11: #{tpu_custom_call.1} parent=5 // pred_region
        %s218 = ssub.s32 %s21, 1
        // Predicated region
        $region13: #{tpu_custom_call.1} parent=11 // pred_check
          %p219 = pneg %p68
        $region14: #{tpu_custom_call.1} parent=11 // pred_check_branch
          %221 = sbr.rel (%p219) target = $region16
        $region15: #{tpu_custom_call.1} parent=11 // pred_region
          _
        $region16: #{tpu_custom_call.1} parent=11 // pred_fallthru
          _
        // Predicated region
        $region17: #{tpu_custom_call.1} parent=11 // pred_check
          %p222 = pneg %p89
        $region18: #{tpu_custom_call.1} parent=11 // pred_check_branch
          %224 = sbr.rel (%p222) target = $region20
        $region19: #{tpu_custom_call.1} parent=11 // pred_region
          _
        $region20: #{tpu_custom_call.1} parent=11 // pred_fallthru
          _
        // Predicated region
        $region21: #{tpu_custom_call.1} parent=11 // pred_check
          %p225 = pneg %p110
        $region22: #{tpu_custom_call.1} parent=11 // pred_check_branch
          %227 = sbr.rel (%p225) target = $region24
        $region23: #{tpu_custom_call.1} parent=11 // pred_region
          _
        $region24: #{tpu_custom_call.1} parent=11 // pred_fallthru
          _
        // Predicated region
        $region25: #{tpu_custom_call.1} parent=11 // pred_check
          %p228 = pneg %p131
        $region26: #{tpu_custom_call.1} parent=11 // pred_check_branch
          %230 = sbr.rel (%p228) target = $region28
        $region27: #{tpu_custom_call.1} parent=11 // pred_region
          _
        $region28: #{tpu_custom_call.1} parent=11 // pred_fallthru
          _
        // Predicated region
        $region29: #{tpu_custom_call.1} parent=11 // pred_check
          %p231 = pneg %p152
        $region30: #{tpu_custom_call.1} parent=11 // pred_check_branch
          %233 = sbr.rel (%p231) target = $region32
        $region31: #{tpu_custom_call.1} parent=11 // pred_region
          %235 = vsyncadd [#allocation3], 0
          %s236 = sshll.u32 %s5, 4
          %s237 = int_to_ptr.hbm [resolvable:$true] %s236
          %s238 = sshll.u32 [#allocation2], 4
          %s239 = int_to_ptr.vmem [resolvable:$true] %s238
          %244 = dma.hbm_to_vmem [thread:$0]  %s237, 1024, %s239, [#allocation3], 128, 128, 8
        $region32: #{tpu_custom_call.1} parent=11 // pred_fallthru
          _
      $region12: #{tpu_custom_call.1} parent=5 // pred_fallthru
        _
      %p245 = scmp.lt.s32.totalorder %s21, 2
      // Predicated region
      $region33: #{tpu_custom_call.1} parent=5 // pred_check
        %p246 = pneg %p245
      $region34: #{tpu_custom_call.1} parent=5 // pred_check_branch
        %248 = sbr.rel (%p246) target = $region36
      $region35: #{tpu_custom_call.1} parent=5 // pred_region
        // Predicated region
        $region37: #{tpu_custom_call.1} parent=35 // pred_check
          %p249 = pneg %p41
        $region38: #{tpu_custom_call.1} parent=35 // pred_check_branch
          %251 = sbr.rel (%p249) target = $region40
        $region39: #{tpu_custom_call.1} parent=35 // pred_region
          %p252 = scmp.lt.s32.totalorder %s21, 1
          %s253 = scalar_select %p252, %s21, 1
          %s254 = smul.addr %s253, 8
          %s255 = smul.addr %s254, 8
          %s256 = scalar_lea.vmem %s0, %s255
        $region40: #{tpu_custom_call.1} parent=35 // pred_fallthru
          _
      $region36: #{tpu_custom_call.1} parent=5 // pred_fallthru
        _
      %p257 = scmp.le.s32.totalorder 1, %s21
      %p258 = scmp.lt.s32.totalorder %s21, 3
      %p259 = pnand %p257, %p258
      %p260 = pneg %p259
      // Predicated region
      $region41: #{tpu_custom_call.1} parent=5 // pred_check
        _
      $region42: #{tpu_custom_call.1} parent=5 // pred_check_branch
        %262 = sbr.rel (%p259) target = $region44
      $region43: #{tpu_custom_call.1} parent=5 // pred_region
        %s263 = ssub.s32 %s21, 1
        // Predicated region
        $region45: #{tpu_custom_call.1} parent=43 // pred_check
          %p264 = pneg %p152
        $region46: #{tpu_custom_call.1} parent=43 // pred_check_branch
          %266 = sbr.rel (%p264) target = $region48
        $region47: #{tpu_custom_call.1} parent=43 // pred_region
          %268 = dma.done [#allocation3], 1024
        $region48: #{tpu_custom_call.1} parent=43 // pred_fallthru
          _
        %p269 = scmp.lt.s32.totalorder %s26, 1
        %s270 = scalar_select %p269, %s26, 1
        %s271 = smul.addr %s270, 8
        %s272 = smul.addr %s271, 8
        %s273 = scalar_lea.vmem %s0, %s272
        %p274 = pneg %p47
        %p275 = pneg %p44
        %p276 = pneg %p68
        %p277 = pneg %p65
        %p278 = pneg %p89
        %p279 = pneg %p86
        %p280 = pneg %p110
        %p281 = pneg %p107
        %p282 = pneg %p131
        %p283 = pneg %p128
        %p284 = pneg %p152
        %p285 = pneg %p149
        %p286 = pneg %p178
        %p287 = pneg %p175
        %s288 = sand.u32 %s165, 1
        %s289 = scalar_lea.sflag [#allocation4], %s288
        %s290 = sand.u32 %s165, 1
        %s291 = smul.addr %s290, 64
        %s292 = scalar_lea.vmem [#allocation5], %s291
        %p293 = pneg %p204
        %p294 = pneg %p201
        %s295 = sand.u32 %s191, 1
        %s296 = scalar_lea.sflag [#allocation7], %s295
        %s297 = sand.u32 %s191, 1
        %s298 = smul.addr %s297, 64
        %s299 = scalar_lea.vmem [#allocation6], %s298
        %p300 = scmp.lt.s32.totalorder %s26, 1
        %s301 = scalar_select %p300, %s26, 1
        %s302 = smul.addr %s301, 8
        %s303 = smul.addr %s302, 8
        %s304 = scalar_lea.vmem %s0, %s303
        %v306 = vld [vmem:[%s1] sm:$0xff]
        %v307 = vld [vmem:[%s1 + $0x8] sm:$0xff]
        %v308 = vld [vmem:[%s1 + $0x10] sm:$0xff]
        %v309 = vld [vmem:[%s1 + $0x18] sm:$0xff]
        %v310 = vld [vmem:[%s1 + $0x20] sm:$0xff]
        %v311 = vld [vmem:[%s1 + $0x28] sm:$0xff]
        %v312 = vld [vmem:[%s1 + $0x30] sm:$0xff]
        %v313 = vld [vmem:[%s1 + $0x38] sm:$0xff]
        %v314 = vpack.c.bf16 %v307, %v306
        %v315 = vpack.c.bf16 %v309, %v308
        %v316 = vpack.c.bf16 %v311, %v310
        %v317 = vpack.c.bf16 %v313, %v312
        %v318 = vld [vmem:[%s304] sm:$0xff]
        %v319 = vld [vmem:[%s304 + $0x8] sm:$0xff]
        %v320 = vld [vmem:[%s304 + $0x10] sm:$0xff]
        %v321 = vld [vmem:[%s304 + $0x18] sm:$0xff]
        %v322 = vld [vmem:[%s304 + $0x20] sm:$0xff]
        %v323 = vld [vmem:[%s304 + $0x28] sm:$0xff]
        %v324 = vld [vmem:[%s304 + $0x30] sm:$0xff]
        %v325 = vld [vmem:[%s304 + $0x38] sm:$0xff]
        %v326 = vld [vmem:[%s2] sm:$0xff]
        %v327 = vld [vmem:[%s2 + $0x8] sm:$0xff]
        %v328 = vld [vmem:[%s2 + $0x10] sm:$0xff]
        %v329 = vld [vmem:[%s2 + $0x18] sm:$0xff]
        %v330 = vpack.c.bf16 %v327, %v326
        %v331 = vpack.c.bf16 %v329, %v328
        %v332 = vpack.c.bf16 %v319, %v318
        %v333 = vpack.c.bf16 %v321, %v320
        %v334 = vpack.c.bf16 %v323, %v322
        %v335 = vpack.c.bf16 %v325, %v324
        %vm336 = vcmask 261120
        %v338 = vsel %vm336, %v332, 0
        %v341 = vsel %vm336, %v333, 0
        %v344 = vsel %vm336, %v334, 0
        %v347 = vsel %vm336, %v335, 0
        %349 = vmatpush.bf16.msra.mxu0 0
        %350 = vmatpush.bf16.msra.mxu0 0
        %351 = vmatpush.bf16.msra.mxu0 0
        %352 = vmatpush.bf16.msra.mxu0 0
        %353 = vmatpush.bf16.msra.mxu0 0
        %354 = vmatpush.bf16.msra.mxu0 0
        %355 = vmatpush.bf16.msra.mxu0 %v331
        %356 = vmatpush.bf16.msra.mxu0 %v330
        %357 = vmatmul.bf16.gmra.mxu0 %v338
        %v358 = vpop.f32.mrf.mxu0
        %v359 = vadd.f32 0.0, %v358
        %v360 = vpop.f32.mrf.mxu0
        %v361 = vadd.f32 0.0, %v360
        %362 = vmatmul.bf16.gmra.mxu0 %v341
        %v363 = vpop.f32.mrf.mxu0
        %v364 = vadd.f32 0.0, %v363
        %v365 = vpop.f32.mrf.mxu0
        %v366 = vadd.f32 0.0, %v365
        %367 = vmatmul.bf16.gmra.mxu0 %v344
        %v368 = vpop.f32.mrf.mxu0
        %v369 = vadd.f32 0.0, %v368
        %v370 = vpop.f32.mrf.mxu0
        %v371 = vadd.f32 0.0, %v370
        %372 = vmatmul.bf16.gmra.mxu0 %v347
        %v373 = vpop.f32.mrf.mxu0
        %v374 = vadd.f32 0.0, %v373
        %v375 = vpop.f32.mrf.mxu0
        %v376 = vadd.f32 0.0, %v375
        %377 = vdwg.mxu0
        %v378 = vpack.c.bf16 %v361, %v359
        %v379 = vpack.c.bf16 %v366, %v364
        %v380 = vpack.c.bf16 %v371, %v369
        %v381 = vpack.c.bf16 %v376, %v374
        %v382 = vld [vmem:[%s3] sm:$0x1]
        %v384 = vperm.slane %v382, 0
        %vm386 = vcmask 523264
        %v388 = vsel %vm386, %v314, 0
        %v391 = vsel %vm386, %v315, 0
        %v394 = vsel %vm386, %v316, 0
        %v397 = vsel %vm386, %v317, 0
        %399 = vmatpush.bf16.msra.mxu0 0
        %400 = vmatpush.bf16.msra.mxu0 0
        %401 = vmatpush.bf16.msra.mxu0 0
        %402 = vmatpush.bf16.msra.mxu0 0
        %403 = vmatpush.bf16.msra.mxu0 %v381
        %404 = vmatpush.bf16.msra.mxu0 %v380
        %405 = vmatpush.bf16.msra.mxu0 %v379
        %406 = vmatpush.bf16.msra.mxu0 %v378
        %407 = vmatmul.bf16.gmra.mxu0 %v388
        %v408 = vpop.f32.mrf.mxu0
        %v409 = vadd.f32 %v384, %v408
        %v410 = vpop.f32.mrf.mxu0
        %v411 = vadd.f32 %v384, %v410
        %412 = vmatmul.bf16.gmra.mxu0 %v391
        %v413 = vpop.f32.mrf.mxu0
        %v414 = vadd.f32 %v384, %v413
        %v415 = vpop.f32.mrf.mxu0
        %v416 = vadd.f32 %v384, %v415
        %417 = vmatmul.bf16.gmra.mxu0 %v394
        %v418 = vpop.f32.mrf.mxu0
        %v419 = vadd.f32 %v384, %v418
        %v420 = vpop.f32.mrf.mxu0
        %v421 = vadd.f32 %v384, %v420
        %422 = vmatmul.bf16.gmra.mxu0 %v397
        %v423 = vpop.f32.mrf.mxu0
        %v424 = vadd.f32 %v384, %v423
        %v425 = vpop.f32.mrf.mxu0
        %v426 = vadd.f32 %v384, %v425
        %427 = vdwg.mxu0
        %v428 = vmax.f32 %v409, 0.0
        %v429 = vmax.f32 %v411, 0.0
        %v430 = vmax.f32 %v414, 0.0
        %v431 = vmax.f32 %v416, 0.0
        %v432 = vmax.f32 %v419, 0.0
        %v433 = vmax.f32 %v421, 0.0
        %v434 = vmax.f32 %v424, 0.0
        %v435 = vmax.f32 %v426, 0.0
        %s436 = scalar_lea.vmem %s2, 32
        %v437 = vld [vmem:[%s436] sm:$0xff]
        %v438 = vld [vmem:[%s436 + $0x8] sm:$0xff]
        %v439 = vld [vmem:[%s436 + $0x10] sm:$0xff]
        %v440 = vld [vmem:[%s436 + $0x18] sm:$0xff]
        %v441 = vpack.c.bf16 %v438, %v437
        %v442 = vpack.c.bf16 %v440, %v439
        %v443 = vpack.c.bf16 %v429, %v428
        %v444 = vpack.c.bf16 %v431, %v430
        %v445 = vpack.c.bf16 %v433, %v432
        %v446 = vpack.c.bf16 %v435, %v434
        %v448 = vsel %vm336, %v443, 0
        %v451 = vsel %vm336, %v444, 0
        %v454 = vsel %vm336, %v445, 0
        %v457 = vsel %vm336, %v446, 0
        %459 = vmatpush.bf16.msra.mxu0 0
        %460 = vmatpush.bf16.msra.mxu0 0
        %461 = vmatpush.bf16.msra.mxu0 0
        %462 = vmatpush.bf16.msra.mxu0 0
        %463 = vmatpush.bf16.msra.mxu0 0
        %464 = vmatpush.bf16.msra.mxu0 0
        %465 = vmatpush.bf16.msra.mxu0 %v442
        %466 = vmatpush.bf16.msra.mxu0 %v441
        %467 = vmatmul.bf16.gmra.mxu0 %v448
        %v468 = vpop.f32.mrf.mxu0
        %v469 = vadd.f32 0.0, %v468
        %v470 = vpop.f32.mrf.mxu0
        %v471 = vadd.f32 0.0, %v470
        %472 = vmatmul.bf16.gmra.mxu0 %v451
        %v473 = vpop.f32.mrf.mxu0
        %v474 = vadd.f32 0.0, %v473
        %v475 = vpop.f32.mrf.mxu0
        %v476 = vadd.f32 0.0, %v475
        %477 = vmatmul.bf16.gmra.mxu0 %v454
        %v478 = vpop.f32.mrf.mxu0
        %v479 = vadd.f32 0.0, %v478
        %v480 = vpop.f32.mrf.mxu0
        %v481 = vadd.f32 0.0, %v480
        %482 = vmatmul.bf16.gmra.mxu0 %v457
        %v483 = vpop.f32.mrf.mxu0
        %v484 = vadd.f32 0.0, %v483
        %v485 = vpop.f32.mrf.mxu0
        %v486 = vadd.f32 0.0, %v485
        %487 = vdwg.mxu0
        %v488 = vpack.c.bf16 %v471, %v469
        %v489 = vpack.c.bf16 %v476, %v474
        %v490 = vpack.c.bf16 %v481, %v479
        %v491 = vpack.c.bf16 %v486, %v484
        %s492 = scalar_lea.vmem %s3, 1
        %v493 = vld [vmem:[%s492] sm:$0x1]
        %v495 = vperm.slane %v493, 0
        %497 = vmatpush.bf16.msra.mxu0 0
        %498 = vmatpush.bf16.msra.mxu0 0
        %499 = vmatpush.bf16.msra.mxu0 0
        %500 = vmatpush.bf16.msra.mxu0 0
        %501 = vmatpush.bf16.msra.mxu0 %v491
        %502 = vmatpush.bf16.msra.mxu0 %v490
        %503 = vmatpush.bf16.msra.mxu0 %v489
        %504 = vmatpush.bf16.msra.mxu0 %v488
        %505 = vmatmul.bf16.gmra.mxu0 %v388
        %v506 = vpop.f32.mrf.mxu0
        %v507 = vadd.f32 %v495, %v506
        %v508 = vpop.f32.mrf.mxu0
        %v509 = vadd.f32 %v495, %v508
        %510 = vmatmul.bf16.gmra.mxu0 %v391
        %v511 = vpop.f32.mrf.mxu0
        %v512 = vadd.f32 %v495, %v511
        %v513 = vpop.f32.mrf.mxu0
        %v514 = vadd.f32 %v495, %v513
        %515 = vmatmul.bf16.gmra.mxu0 %v394
        %v516 = vpop.f32.mrf.mxu0
        %v517 = vadd.f32 %v495, %v516
        %v518 = vpop.f32.mrf.mxu0
        %v519 = vadd.f32 %v495, %v518
        %520 = vmatmul.bf16.gmra.mxu0 %v397
        %v521 = vpop.f32.mrf.mxu0
        %v522 = vadd.f32 %v495, %v521
        %v523 = vpop.f32.mrf.mxu0
        %v524 = vadd.f32 %v495, %v523
        %525 = vdwg.mxu0
        %v526 = vmul.f32 %v507, %v507
        %v527 = vmul.f32 %v509, %v509
        %v528 = vmul.f32 %v512, %v512
        %v529 = vmul.f32 %v514, %v514
        %v530 = vmul.f32 %v517, %v517
        %v531 = vmul.f32 %v519, %v519
        %v532 = vmul.f32 %v522, %v522
        %v533 = vmul.f32 %v524, %v524
        %v534 = vsel %vm336, %v526, 0.0
        %535 = vadd.xlane.f32.xlu0 %v534
        %v536 = vpop.xlane.xlu0 %535
        %v537 = vsel %vm336, %v527, 0.0
        %538 = vadd.xlane.f32.xlu0 %v537
        %v539 = vpop.xlane.xlu0 %538
        %v540 = vsel %vm336, %v528, 0.0
        %541 = vadd.xlane.f32.xlu0 %v540
        %v542 = vpop.xlane.xlu0 %541
        %v543 = vsel %vm336, %v529, 0.0
        %544 = vadd.xlane.f32.xlu0 %v543
        %v545 = vpop.xlane.xlu0 %544
        %v546 = vsel %vm336, %v530, 0.0
        %547 = vadd.xlane.f32.xlu0 %v546
        %v548 = vpop.xlane.xlu0 %547
        %v549 = vsel %vm336, %v531, 0.0
        %550 = vadd.xlane.f32.xlu0 %v549
        %v551 = vpop.xlane.xlu0 %550
        %v552 = vsel %vm336, %v532, 0.0
        %553 = vadd.xlane.f32.xlu0 %v552
        %v554 = vpop.xlane.xlu0 %553
        %v555 = vsel %vm336, %v533, 0.0
        %556 = vadd.xlane.f32.xlu0 %v555
        %v557 = vpop.xlane.xlu0 %556
        %v558 = vadd.f32 %v536, 1e-08
        %v559 = vadd.f32 %v539, 1e-08
        %v560 = vadd.f32 %v542, 1e-08
        %v561 = vadd.f32 %v545, 1e-08
        %v562 = vadd.f32 %v548, 1e-08
        %v563 = vadd.f32 %v551, 1e-08
        %v564 = vadd.f32 %v554, 1e-08
        %v565 = vadd.f32 %v557, 1e-08
        %v566 = vrsqrt.pop %v558
        %v567 = vmul.f32 %v566, %v558
        %v568 = vmul.f32 %v567, %v566
        %v569 = vmul.f32 0.5, %v568
        %v570 = vsub.f32 1.5, %v569
        %v571 = vmul.f32 %v566, %v570
        %vm572 = vweird.f32 %v558
        %vm573 = vweird.f32 %v566
        %vm574 = vmor %vm572, %vm573
        %v575 = vsel %vm574, %v566, %v571
        %v576 = vrsqrt.pop %v559
        %v577 = vmul.f32 %v576, %v559
        %v578 = vmul.f32 %v577, %v576
        %v579 = vmul.f32 0.5, %v578
        %v580 = vsub.f32 1.5, %v579
        %v581 = vmul.f32 %v576, %v580
        %vm582 = vweird.f32 %v559
        %vm583 = vweird.f32 %v576
        %vm584 = vmor %vm582, %vm583
        %v585 = vsel %vm584, %v576, %v581
        %v586 = vrsqrt.pop %v560
        %v587 = vmul.f32 %v586, %v560
        %v588 = vmul.f32 %v587, %v586
        %v589 = vmul.f32 0.5, %v588
        %v590 = vsub.f32 1.5, %v589
        %v591 = vmul.f32 %v586, %v590
        %vm592 = vweird.f32 %v560
        %vm593 = vweird.f32 %v586
        %vm594 = vmor %vm592, %vm593
        %v595 = vsel %vm594, %v586, %v591
        %v596 = vrsqrt.pop %v561
        %v597 = vmul.f32 %v596, %v561
        %v598 = vmul.f32 %v597, %v596
        %v599 = vmul.f32 0.5, %v598
        %v600 = vsub.f32 1.5, %v599
        %v601 = vmul.f32 %v596, %v600
        %vm602 = vweird.f32 %v561
        %vm603 = vweird.f32 %v596
        %vm604 = vmor %vm602, %vm603
        %v605 = vsel %vm604, %v596, %v601
        %v606 = vrsqrt.pop %v562
        %v607 = vmul.f32 %v606, %v562
        %v608 = vmul.f32 %v607, %v606
        %v609 = vmul.f32 0.5, %v608
        %v610 = vsub.f32 1.5, %v609
        %v611 = vmul.f32 %v606, %v610
        %vm612 = vweird.f32 %v562
        %vm613 = vweird.f32 %v606
        %vm614 = vmor %vm612, %vm613
        %v615 = vsel %vm614, %v606, %v611
        %v616 = vrsqrt.pop %v563
        %v617 = vmul.f32 %v616, %v563
        %v618 = vmul.f32 %v617, %v616
        %v619 = vmul.f32 0.5, %v618
        %v620 = vsub.f32 1.5, %v619
        %v621 = vmul.f32 %v616, %v620
        %vm622 = vweird.f32 %v563
        %vm623 = vweird.f32 %v616
        %vm624 = vmor %vm622, %vm623
        %v625 = vsel %vm624, %v616, %v621
        %v626 = vrsqrt.pop %v564
        %v627 = vmul.f32 %v626, %v564
        %v628 = vmul.f32 %v627, %v626
        %v629 = vmul.f32 0.5, %v628
        %v630 = vsub.f32 1.5, %v629
        %v631 = vmul.f32 %v626, %v630
        %vm632 = vweird.f32 %v564
        %vm633 = vweird.f32 %v626
        %vm634 = vmor %vm632, %vm633
        %v635 = vsel %vm634, %v626, %v631
        %v636 = vrsqrt.pop %v565
        %v637 = vmul.f32 %v636, %v565
        %v638 = vmul.f32 %v637, %v636
        %v639 = vmul.f32 0.5, %v638
        %v640 = vsub.f32 1.5, %v639
        %v641 = vmul.f32 %v636, %v640
        %vm642 = vweird.f32 %v565
        %vm643 = vweird.f32 %v636
        %vm644 = vmor %vm642, %vm643
        %v645 = vsel %vm644, %v636, %v641
        %v646 = vmul.f32 %v507, %v575
        %v647 = vmul.f32 %v509, %v585
        %v648 = vmul.f32 %v512, %v595
        %v649 = vmul.f32 %v514, %v605
        %v650 = vmul.f32 %v517, %v615
        %v651 = vmul.f32 %v519, %v625
        %v652 = vmul.f32 %v522, %v635
        %v653 = vmul.f32 %v524, %v645
        %v654 = vpack.c.bf16 %v647, %v646
        %v655 = vpack.c.bf16 %v649, %v648
        %v656 = vpack.c.bf16 %v651, %v650
        %v657 = vpack.c.bf16 %v653, %v652
        %v659 = vsel %vm336, %v654, 0
        %v662 = vsel %vm336, %v655, 0
        %v665 = vsel %vm336, %v656, 0
        %v668 = vsel %vm336, %v657, 0
        %670 = vmatpush.bf16.xpose.msra.mxu0 0
        %671 = vmatpush.bf16.xpose.msra.mxu0 0
        %672 = vmatpush.bf16.xpose.msra.mxu0 0
        %673 = vmatpush.bf16.xpose.msra.mxu0 0
        %674 = vmatpush.bf16.xpose.msra.mxu0 %v668
        %675 = vmatpush.bf16.xpose.msra.mxu0 %v665
        %676 = vmatpush.bf16.xpose.msra.mxu0 %v662
        %677 = vmatpush.bf16.xpose.msra.mxu0 %v659
        %678 = vmatmul.bf16.gmra.mxu0 %v659
        %v679 = vpop.f32.mrf.mxu0
        %v680 = vadd.f32 0.0, %v679
        %v681 = vpop.f32.mrf.mxu0
        %v682 = vadd.f32 0.0, %v681
        %683 = vmatmul.bf16.gmra.mxu0 %v662
        %v684 = vpop.f32.mrf.mxu0
        %v685 = vadd.f32 0.0, %v684
        %v686 = vpop.f32.mrf.mxu0
        %v687 = vadd.f32 0.0, %v686
        %688 = vmatmul.bf16.gmra.mxu0 %v665
        %v689 = vpop.f32.mrf.mxu0
        %v690 = vadd.f32 0.0, %v689
        %v691 = vpop.f32.mrf.mxu0
        %v692 = vadd.f32 0.0, %v691
        %693 = vmatmul.bf16.gmra.mxu0 %v668
        %v694 = vpop.f32.mrf.mxu0
        %v695 = vadd.f32 0.0, %v694
        %v696 = vpop.f32.mrf.mxu0
        %v697 = vadd.f32 0.0, %v696
        %698 = vdwg.mxu0
        %v699 = vmax.f32 %v680, 0.0
        %v700 = vmax.f32 %v682, 0.0
        %v701 = vmax.f32 %v685, 0.0
        %v702 = vmax.f32 %v687, 0.0
        %v703 = vmax.f32 %v690, 0.0
        %v704 = vmax.f32 %v692, 0.0
        %v705 = vmax.f32 %v695, 0.0
        %v706 = vmax.f32 %v697, 0.0
        %v707 = vmul.f32 %v699, 0.5
        %v708 = vmul.f32 %v700, 0.5
        %v709 = vmul.f32 %v701, 0.5
        %v710 = vmul.f32 %v702, 0.5
        %v711 = vmul.f32 %v703, 0.5
        %v712 = vmul.f32 %v704, 0.5
        %v713 = vmul.f32 %v705, 0.5
        %v714 = vmul.f32 %v706, 0.5
        %v715 = vld [vmem:[%s4] sm:$0xff]
        %v716 = vld [vmem:[%s4 + $0x8] sm:$0xff]
        %v717 = vld [vmem:[%s4 + $0x10] sm:$0xff]
        %v718 = vld [vmem:[%s4 + $0x18] sm:$0xff]
        %v719 = vld [vmem:[%s4 + $0x20] sm:$0xff]
        %v720 = vld [vmem:[%s4 + $0x28] sm:$0xff]
        %v721 = vld [vmem:[%s4 + $0x30] sm:$0xff]
        %v722 = vld [vmem:[%s4 + $0x38] sm:$0xff]
        %v723 = vmul.f32 %v715, 0.5
        %v724 = vmul.f32 %v716, 0.5
        %v725 = vmul.f32 %v717, 0.5
        %v726 = vmul.f32 %v718, 0.5
        %v727 = vmul.f32 %v719, 0.5
        %v728 = vmul.f32 %v720, 0.5
        %v729 = vmul.f32 %v721, 0.5
        %v730 = vmul.f32 %v722, 0.5
        %v731 = vadd.f32 %v707, %v723
        %v732 = vadd.f32 %v708, %v724
        %v733 = vadd.f32 %v709, %v725
        %v734 = vadd.f32 %v710, %v726
        %v735 = vadd.f32 %v711, %v727
        %v736 = vadd.f32 %v712, %v728
        %v737 = vadd.f32 %v713, %v729
        %v738 = vadd.f32 %v714, %v730
        %v739 = vld [vmem:[#allocation2] sm:$0xff]
        %v740 = vld [vmem:[#allocation2 + $0x8] sm:$0xff]
        %v741 = vld [vmem:[#allocation2 + $0x10] sm:$0xff]
        %v742 = vld [vmem:[#allocation2 + $0x18] sm:$0xff]
        %v743 = vld [vmem:[#allocation2 + $0x20] sm:$0xff]
        %v744 = vld [vmem:[#allocation2 + $0x28] sm:$0xff]
        %v745 = vld [vmem:[#allocation2 + $0x30] sm:$0xff]
        %v746 = vld [vmem:[#allocation2 + $0x38] sm:$0xff]
        %v747 = vmul.f32 %v731, %v739
        %v748 = vmul.f32 %v732, %v740
        %v749 = vmul.f32 %v733, %v741
        %v750 = vmul.f32 %v734, %v742
        %v751 = vmul.f32 %v735, %v743
        %v752 = vmul.f32 %v736, %v744
        %v753 = vmul.f32 %v737, %v745
        %v754 = vmul.f32 %v738, %v746
        %v755 = vsel %vm386, %v747, 0.0
        %756 = vadd.xlane.f32.xlu0 %v755
        %v757 = vpop.xlane.xlu0 %756
        %v758 = vsel %vm386, %v748, 0.0
        %759 = vadd.xlane.f32.xlu0 %v758
        %v760 = vpop.xlane.xlu0 %759
        %v761 = vsel %vm386, %v749, 0.0
        %762 = vadd.xlane.f32.xlu0 %v761
        %v763 = vpop.xlane.xlu0 %762
        %v764 = vsel %vm386, %v750, 0.0
        %765 = vadd.xlane.f32.xlu0 %v764
        %v766 = vpop.xlane.xlu0 %765
        %v767 = vsel %vm386, %v751, 0.0
        %768 = vadd.xlane.f32.xlu0 %v767
        %v769 = vpop.xlane.xlu0 %768
        %v770 = vsel %vm386, %v752, 0.0
        %771 = vadd.xlane.f32.xlu0 %v770
        %v772 = vpop.xlane.xlu0 %771
        %v773 = vsel %vm386, %v753, 0.0
        %774 = vadd.xlane.f32.xlu0 %v773
        %v775 = vpop.xlane.xlu0 %774
        %v776 = vsel %vm386, %v754, 0.0
        %777 = vadd.xlane.f32.xlu0 %v776
        %v778 = vpop.xlane.xlu0 %777
        %v779 = vadd.f32 %v755, %v758
        %v780 = vadd.f32 %v779, %v761
        %v781 = vadd.f32 %v780, %v764
        %v782 = vadd.f32 %v781, %v767
        %v783 = vadd.f32 %v782, %v770
        %v784 = vadd.f32 %v783, %v773
        %v785 = vadd.f32 %v784, %v776
        %v786 = vrot.slane %v785, 4
        %v787 = vadd.f32 %v785, %v786
        %v788 = vrot.slane %v787, 2
        %v789 = vadd.f32 %v787, %v788
        %v790 = vrot.slane %v789, 1
        %v791 = vadd.f32 %v789, %v790
        %v792 = vadd.f32 %v757, 1e-20
        %v793 = vadd.f32 %v760, 1e-20
        %v794 = vadd.f32 %v763, 1e-20
        %v795 = vadd.f32 %v766, 1e-20
        %v796 = vadd.f32 %v769, 1e-20
        %v797 = vadd.f32 %v772, 1e-20
        %v798 = vadd.f32 %v775, 1e-20
        %v799 = vadd.f32 %v778, 1e-20
        %v800 = vrsqrt.pop %v792
        %v801 = vmul.f32 %v800, %v792
        %v802 = vmul.f32 %v801, %v800
        %v803 = vmul.f32 0.5, %v802
        %v804 = vsub.f32 1.5, %v803
        %v805 = vmul.f32 %v800, %v804
        %vm806 = vweird.f32 %v792
        %vm807 = vweird.f32 %v800
        %vm808 = vmor %vm806, %vm807
        %v809 = vsel %vm808, %v800, %v805
        %v810 = vrsqrt.pop %v793
        %v811 = vmul.f32 %v810, %v793
        %v812 = vmul.f32 %v811, %v810
        %v813 = vmul.f32 0.5, %v812
        %v814 = vsub.f32 1.5, %v813
        %v815 = vmul.f32 %v810, %v814
        %vm816 = vweird.f32 %v793
        %vm817 = vweird.f32 %v810
        %vm818 = vmor %vm816, %vm817
        %v819 = vsel %vm818, %v810, %v815
        %v820 = vrsqrt.pop %v794
        %v821 = vmul.f32 %v820, %v794
        %v822 = vmul.f32 %v821, %v820
        %v823 = vmul.f32 0.5, %v822
        %v824 = vsub.f32 1.5, %v823
        %v825 = vmul.f32 %v820, %v824
        %vm826 = vweird.f32 %v794
        %vm827 = vweird.f32 %v820
        %vm828 = vmor %vm826, %vm827
        %v829 = vsel %vm828, %v820, %v825
        %v830 = vrsqrt.pop %v795
        %v831 = vmul.f32 %v830, %v795
        %v832 = vmul.f32 %v831, %v830
        %v833 = vmul.f32 0.5, %v832
        %v834 = vsub.f32 1.5, %v833
        %v835 = vmul.f32 %v830, %v834
        %vm836 = vweird.f32 %v795
        %vm837 = vweird.f32 %v830
        %vm838 = vmor %vm836, %vm837
        %v839 = vsel %vm838, %v830, %v835
        %v840 = vrsqrt.pop %v796
        %v841 = vmul.f32 %v840, %v796
        %v842 = vmul.f32 %v841, %v840
        %v843 = vmul.f32 0.5, %v842
        %v844 = vsub.f32 1.5, %v843
        %v845 = vmul.f32 %v840, %v844
        %vm846 = vweird.f32 %v796
        %vm847 = vweird.f32 %v840
        %vm848 = vmor %vm846, %vm847
        %v849 = vsel %vm848, %v840, %v845
        %v850 = vrsqrt.pop %v797
        %v851 = vmul.f32 %v850, %v797
        %v852 = vmul.f32 %v851, %v850
        %v853 = vmul.f32 0.5, %v852
        %v854 = vsub.f32 1.5, %v853
        %v855 = vmul.f32 %v850, %v854
        %vm856 = vweird.f32 %v797
        %vm857 = vweird.f32 %v850
        %vm858 = vmor %vm856, %vm857
        %v859 = vsel %vm858, %v850, %v855
        %v860 = vrsqrt.pop %v798
        %v861 = vmul.f32 %v860, %v798
        %v862 = vmul.f32 %v861, %v860
        %v863 = vmul.f32 0.5, %v862
        %v864 = vsub.f32 1.5, %v863
        %v865 = vmul.f32 %v860, %v864
        %vm866 = vweird.f32 %v798
        %vm867 = vweird.f32 %v860
        %vm868 = vmor %vm866, %vm867
        %v869 = vsel %vm868, %v860, %v865
        %v870 = vrsqrt.pop %v799
        %v871 = vmul.f32 %v870, %v799
        %v872 = vmul.f32 %v871, %v870
        %v873 = vmul.f32 0.5, %v872
        %v874 = vsub.f32 1.5, %v873
        %v875 = vmul.f32 %v870, %v874
        %vm876 = vweird.f32 %v799
        %vm877 = vweird.f32 %v870
        %vm878 = vmor %vm876, %vm877
        %v879 = vsel %vm878, %v870, %v875
        %v880 = vmul.f32 %v809, %v747
        %v881 = vmul.f32 %v819, %v748
        %v882 = vmul.f32 %v829, %v749
        %v883 = vmul.f32 %v839, %v750
        %v884 = vmul.f32 %v849, %v751
        %v885 = vmul.f32 %v859, %v752
        %v886 = vmul.f32 %v869, %v753
        %v887 = vmul.f32 %v879, %v754
        %v888 = vadd.f32 %v791, 1e-20
        %v889 = vrsqrt.pop %v888
        %v890 = vmul.f32 %v889, %v888
        %v891 = vmul.f32 %v890, %v889
        %v892 = vmul.f32 0.5, %v891
        %v893 = vsub.f32 1.5, %v892
        %v894 = vmul.f32 %v889, %v893
        %vm895 = vweird.f32 %v888
        %vm896 = vweird.f32 %v889
        %vm897 = vmor %vm895, %vm896
        %v898 = vsel %vm897, %v889, %v894
        %v899 = vmul.f32 %v880, %v898
        %v900 = vmul.f32 %v881, %v898
        %v901 = vmul.f32 %v882, %v898
        %v902 = vmul.f32 %v883, %v898
        %v903 = vmul.f32 %v884, %v898
        %v904 = vmul.f32 %v885, %v898
        %v905 = vmul.f32 %v886, %v898
        %v906 = vmul.f32 %v887, %v898
        %907 = vst.msk [vmem:[%s292] sm:$0xff] %vm386, %v899
        %908 = vst.msk [vmem:[%s292 + $0x8] sm:$0xff] %vm386, %v900
        %909 = vst.msk [vmem:[%s292 + $0x10] sm:$0xff] %vm386, %v901
        %910 = vst.msk [vmem:[%s292 + $0x18] sm:$0xff] %vm386, %v902
        %911 = vst.msk [vmem:[%s292 + $0x20] sm:$0xff] %vm386, %v903
        %912 = vst.msk [vmem:[%s292 + $0x28] sm:$0xff] %vm386, %v904
        %913 = vst.msk [vmem:[%s292 + $0x30] sm:$0xff] %vm386, %v905
        %914 = vst.msk [vmem:[%s292 + $0x38] sm:$0xff] %vm386, %v906
        %915 = vst.msk [vmem:[%s299] sm:$0xff] %vm386, %v747
        %916 = vst.msk [vmem:[%s299 + $0x8] sm:$0xff] %vm386, %v748
        %917 = vst.msk [vmem:[%s299 + $0x10] sm:$0xff] %vm386, %v749
        %918 = vst.msk [vmem:[%s299 + $0x18] sm:$0xff] %vm386, %v750
        %919 = vst.msk [vmem:[%s299 + $0x20] sm:$0xff] %vm386, %v751
        %920 = vst.msk [vmem:[%s299 + $0x28] sm:$0xff] %vm386, %v752
        %921 = vst.msk [vmem:[%s299 + $0x30] sm:$0xff] %vm386, %v753
        %922 = vst.msk [vmem:[%s299 + $0x38] sm:$0xff] %vm386, %v754
        %s923 = sand.u32 %s165, 1
        %s924 = scalar_lea.sflag [#allocation4], %s923
        %s925 = sand.u32 %s165, 1
        %s926 = smul.addr %s925, 64
        %s927 = scalar_lea.vmem [#allocation5], %s926
        %s928 = sand.u32 %s191, 1
        %s929 = scalar_lea.sflag [#allocation7], %s928
        %s930 = sand.u32 %s191, 1
        %s931 = smul.addr %s930, 64
        %s932 = scalar_lea.vmem [#allocation6], %s931
        // Predicated region
        $region49: #{tpu_custom_call.1} parent=43 // pred_check
          %p933 = pneg %p175
        $region50: #{tpu_custom_call.1} parent=43 // pred_check_branch
          %935 = sbr.rel (%p933) target = $region52
        $region51: #{tpu_custom_call.1} parent=43 // pred_region
          %937 = vsyncadd %s924, 0
          %s938 = smul.addr %s26, 8
          %s939 = smul.addr %s938, 8
          %s940 = scalar_lea.hbm %s6, %s939
          %s941 = sshll.u32 %s927, 4
          %s942 = int_to_ptr.vmem [resolvable:$true] %s941
          %s943 = sshll.u32 %s940, 4
          %s944 = int_to_ptr.hbm [resolvable:$true] %s943
          %949 = dma.vmem_to_hbm [thread:$0]  %s942, 1024, %s944, %s924, 128, 128, 8
        $region52: #{tpu_custom_call.1} parent=43 // pred_fallthru
          _
        // Predicated region
        $region53: #{tpu_custom_call.1} parent=43 // pred_check
          %p950 = pneg %p201
        $region54: #{tpu_custom_call.1} parent=43 // pred_check_branch
          %952 = sbr.rel (%p950) target = $region56
        $region55: #{tpu_custom_call.1} parent=43 // pred_region
          %954 = vsyncadd %s929, 0
          %s955 = smul.addr %s26, 8
          %s956 = smul.addr %s955, 8
          %s957 = scalar_lea.hbm %s7, %s956
          %s958 = sshll.u32 %s932, 4
          %s959 = int_to_ptr.vmem [resolvable:$true] %s958
          %s960 = sshll.u32 %s957, 4
          %s961 = int_to_ptr.hbm [resolvable:$true] %s960
          %966 = dma.vmem_to_hbm [thread:$0]  %s959, 1024, %s961, %s929, 128, 128, 8
        $region56: #{tpu_custom_call.1} parent=43 // pred_fallthru
          _
      $region44: #{tpu_custom_call.1} parent=5 // pred_fallthru
        _
      %p967 = scmp.le.s32.totalorder 2, %s21
      // Predicated region
      $region57: #{tpu_custom_call.1} parent=5 // pred_check
        %p968 = pneg %p967
      $region58: #{tpu_custom_call.1} parent=5 // pred_check_branch
        %970 = sbr.rel (%p968) target = $region60
      $region59: #{tpu_custom_call.1} parent=5 // pred_region
        %s971 = ssub.s32 %s21, 2
        // Predicated region
        $region61: #{tpu_custom_call.1} parent=59 // pred_check
          %p972 = pneg %p181
        $region62: #{tpu_custom_call.1} parent=59 // pred_check_branch
          %974 = sbr.rel (%p972) target = $region64
        $region63: #{tpu_custom_call.1} parent=59 // pred_region
          %s975 = sand.u32 %s166, 1
          %s976 = scalar_lea.sflag [#allocation4], %s975
          %s977 = sand.u32 %s166, 1
          %s978 = smul.addr %s977, 64
          %s979 = scalar_lea.vmem [#allocation5], %s978
          %981 = dma.done %s976, 1024
        $region64: #{tpu_custom_call.1} parent=59 // pred_fallthru
          _
        // Predicated region
        $region65: #{tpu_custom_call.1} parent=59 // pred_check
          %p982 = pneg %p207
        $region66: #{tpu_custom_call.1} parent=59 // pred_check_branch
          %984 = sbr.rel (%p982) target = $region68
        $region67: #{tpu_custom_call.1} parent=59 // pred_region
          %s985 = sand.u32 %s192, 1
          %s986 = scalar_lea.sflag [#allocation7], %s985
          %s987 = sand.u32 %s192, 1
          %s988 = smul.addr %s987, 64
          %s989 = scalar_lea.vmem [#allocation6], %s988
          %991 = dma.done %s986, 1024
        $region68: #{tpu_custom_call.1} parent=59 // pred_fallthru
          _
      $region60: #{tpu_custom_call.1} parent=5 // pred_fallthru
        _
    $region6: #{tpu_custom_call.1} parent=1 // loop_footer
      %s25 = sadd.s32 1, %s21
    $region7: #{tpu_custom_call.1} parent=1 // loop_footer_branch
      %20 = sbr.rel target = $region3
    $region8: #{tpu_custom_call.1} parent=1 // loop_exit
      _
    %992 = vsyncpa [#allocation3], 1
    %s993 = scalar_lea.sflag [#allocation3], 1
    %994 = vsyncpa %s993, 1
    %995 = vsyncpa [#allocation4], 1
    %s996 = scalar_lea.sflag [#allocation4], 1
    %997 = vsyncpa %s996, 1
    %998 = vsyncpa [#allocation7], 1
    %s999 = scalar_lea.sflag [#allocation7], 1
    %1000 = vsyncpa %s999, 1

</llo_original>
